<compile_context>
chip_gen: v5e
topology: v5e:2x2
jax: 0.10.0
libtpu: 0.0.40
codegen_flags: <defaults>
</compile_context>

<pallas_src>
import math
import functools

import jax
import jax.numpy as jnp
from jax.experimental import pallas as pl
from jax.experimental.pallas import tpu as pltpu

_LANE = 128                       # vreg lane width (last dim)
_SUBLANE = 16                     # bf16 sublane packing (second-to-last dim)
_VMEM_LIMIT = 48 * 1024 * 1024    # safe on v7x (64 MiB physical), fine on v5e/v6e
_FUSED_RESIDENT_BUDGET = 36 * 1024 * 1024


def _round_up(x, m):
    return ((x + m - 1) // m) * m


def _pick_tile(dim, cap, unit):
    """Largest multiple of `unit` <= cap that divides `dim` (dim % unit == 0)."""
    best = unit
    t = unit
    lim = min(cap, dim)
    while t <= lim:
        if dim % t == 0:
            best = t
        t += unit
    return best


# ---------------------------------------------------------------------------
# Fused MLP kernel: both weight panels resident in VMEM, grid only over M.
# ---------------------------------------------------------------------------
def _fused_mlp_kernel(x_ref, w1_ref, b1_ref, w2_ref, b2_ref, o_ref, *,
                      negative_slope):
    # layer 1: (tm, Kp) @ (Kp, Hp) on the MXU, f32 accumulation
    h = jnp.dot(x_ref[...], w1_ref[...], preferred_element_type=jnp.float32)
    h = h + b1_ref[...]
    h = jnp.where(h >= 0, h, negative_slope * h)       # fused LeakyReLU
    # TODO(synk): training-mode dropout (p > 0) not implemented; module default
    # dropout=0.0 / eval mode makes F.dropout the identity.
    y = jnp.dot(h.astype(w2_ref.dtype), w2_ref[...],
                preferred_element_type=jnp.float32)
    o_ref[...] = (y + b2_ref[...]).astype(o_ref.dtype)


def _fused_mlp(xp, w1p, b1p, w2p, b2p, *, negative_slope, tm):
    Mp, Kp = xp.shape
    _, Hp = w1p.shape
    _, Np = w2p.shape

    flops = 2 * Mp * (Kp * Hp + Hp * Np)
    bytes_accessed = (Mp * Kp * 2 + Kp * Hp * 2 + Hp * Np * 2
                      + (Hp + Np) * 4 + Mp * Np * 4)

    return pl.pallas_call(
        functools.partial(_fused_mlp_kernel, negative_slope=negative_slope),
        out_shape=jax.ShapeDtypeStruct((Mp, Np), jnp.float32),
        grid_spec=pltpu.PrefetchScalarGridSpec(
            num_scalar_prefetch=0,
            grid=(Mp // tm,),
            in_specs=[
                pl.BlockSpec((tm, Kp), lambda i: (i, 0)),   # x streamed over M
                pl.BlockSpec((Kp, Hp), lambda i: (0, 0)),   # W1 resident
                pl.BlockSpec((1, Hp), lambda i: (0, 0)),    # b1 resident
                pl.BlockSpec((Hp, Np), lambda i: (0, 0)),   # W2 resident
                pl.BlockSpec((1, Np), lambda i: (0, 0)),    # b2 resident
            ],
            out_specs=pl.BlockSpec((tm, Np), lambda i: (i, 0)),
        ),
        compiler_params=pltpu.CompilerParams(
            dimension_semantics=("parallel",),
            vmem_limit_bytes=_VMEM_LIMIT,
        ),
        cost_estimate=pl.CostEstimate(flops=flops, transcendentals=0,
                                      bytes_accessed=int(bytes_accessed)),
    )(xp, w1p, b1p, w2p, b2p)


# ---------------------------------------------------------------------------
# Fallback: generic tiled linear (for weights too large to keep resident).
# ---------------------------------------------------------------------------
def _linear_kernel(x_ref, w_ref, b_ref, o_ref, acc_ref, *, negative_slope):
    """One (tm, tn) output tile of y = act(x @ W + b).
    Grid axes: (i: M tiles, j: N tiles, k: K reduction, 'arbitrary')."""
    k = pl.program_id(2)
    part = jnp.dot(x_ref[...], w_ref[...], preferred_element_type=jnp.float32)

    @pl.when(k == 0)
    def _init():
        acc_ref[...] = part                       # assign, no zero-fill + add

    @pl.when(k > 0)
    def _accumulate():
        acc_ref[...] += part

    @pl.when(k == pl.num_programs(2) - 1)
    def _finalize():
        y = acc_ref[...] + b_ref[...]             # (tm, tn) + (1, tn), f32
        if negative_slope is not None:            # fused LeakyReLU
            y = jnp.where(y >= 0, y, negative_slope * y)
        o_ref[...] = y.astype(o_ref.dtype)


def _pallas_linear(xp, wp, bp, *, negative_slope, out_dtype,
                   tm_cap=512, tn_cap=512, tk_cap=512):
    """y = act(xp @ wp + bp) on pre-padded operands.

    xp: (Mp, Kp) bf16, wp: (Kp, Np) bf16, bp: (1, Np) f32, with Mp % 16 == 0,
    Kp % 128 == 0, Np % 128 == 0.  Returns (Mp, Np) `out_dtype`."""
    Mp, Kp = xp.shape
    _, Np = wp.shape
    tm = _pick_tile(Mp, tm_cap, _SUBLANE)
    tn = _pick_tile(Np, tn_cap, _LANE)
    tk = _pick_tile(Kp, tk_cap, _LANE)
    grid = (Mp // tm, Np // tn, Kp // tk)

    flops = 2 * Mp * Np * Kp
    bytes_accessed = (Mp * Kp * 2 * (Np // tn)       # x re-streamed per j tile
                      + Kp * Np * 2 * (Mp // tm)     # W re-streamed per i tile
                      + Np * 4 + Mp * Np * jnp.dtype(out_dtype).itemsize)

    return pl.pallas_call(
        functools.partial(_linear_kernel, negative_slope=negative_slope),
        out_shape=jax.ShapeDtypeStruct((Mp, Np), out_dtype),
        grid_spec=pltpu.PrefetchScalarGridSpec(
            num_scalar_prefetch=0,
            grid=grid,
            in_specs=[
                pl.BlockSpec((tm, tk), lambda i, j, k: (i, k)),   # x tile
                pl.BlockSpec((tk, tn), lambda i, j, k: (k, j)),   # W tile
                pl.BlockSpec((1, tn), lambda i, j, k: (0, j)),    # bias tile
            ],
            out_specs=pl.BlockSpec((tm, tn), lambda i, j, k: (i, j)),
            scratch_shapes=[pltpu.VMEM((tm, tn), jnp.float32)],   # f32 accumulator
        ),
        compiler_params=pltpu.CompilerParams(
            dimension_semantics=("parallel", "parallel", "arbitrary"),
            vmem_limit_bytes=_VMEM_LIMIT,
        ),
        cost_estimate=pl.CostEstimate(flops=flops, transcendentals=0,
                                      bytes_accessed=int(bytes_accessed)),
    )(xp, wp, bp)


# ---------------------------------------------------------------------------
# Parameter preparation (one-time, outside the per-step forward).
# ---------------------------------------------------------------------------
def prepare_mlp_params(w1, b1, w2, b2, *, weight_dtype=jnp.bfloat16):
    """Cast + lane-pad the MLP parameters once so every forward reads bf16
    weights straight from HBM (no per-call cast / pad copies)."""
    K, H = w1.shape
    H2, N = w2.shape
    assert H == H2 and b1.shape == (H,) and b2.shape == (N,)
    Kp, Hp, Np = (_round_up(d, _LANE) for d in (K, H, N))

    def pad2(a, r, c):
        if a.shape == (r, c):
            return a
        return jnp.pad(a, ((0, r - a.shape[0]), (0, c - a.shape[1])))

    w1p = pad2(w1.astype(weight_dtype), Kp, Hp)
    w2p = pad2(w2.astype(weight_dtype), Hp, Np)
    b1p = pad2(b1.astype(jnp.float32).reshape(1, H), 1, Hp)
    b2p = pad2(b2.astype(jnp.float32).reshape(1, N), 1, Np)
    return w1p, b1p, w2p, b2p


@functools.partial(jax.jit, static_argnames=("out_feats", "negative_slope"))
def mlp_forward(x, w1p, b1p, w2p, b2p, *, out_feats, negative_slope=0.01):
    """MultiLayerPerceptron.forward (eval mode / dropout=0.0):
        y = leaky_relu(x @ W1 + b1) @ W2 + b2
    `x` has arbitrary leading dims, last dim = in_feats (unpadded).
    Weight/bias args come from prepare_mlp_params()."""
    lead = x.shape[:-1]
    K = x.shape[-1]
    Kp, Hp = w1p.shape
    _, Np = w2p.shape
    assert Kp == _round_up(K, _LANE)

    x2 = x.reshape(-1, K)
    M = x2.shape[0]
    xp = x2.astype(jnp.bfloat16)

    # Path choice (static): fused single kernel if the resident weights plus
    # the streamed x / out tiles fit the conservative (v7x-safe) VMEM budget.
    tm_fused = min(256, _round_up(M, _SUBLANE))
    resident_bytes = 2 * (Kp * Hp + Hp * Np) + 4 * (Hp + Np)
    tile_bytes = (2 * tm_fused * Kp * 2          # double-buffered x tiles
                  + 2 * tm_fused * Np * 4        # double-buffered out tiles
                  + tm_fused * Hp * 4)           # in-kernel h intermediate
    use_fused = resident_bytes + tile_bytes <= _FUSED_RESIDENT_BUDGET

    if use_fused:
        Mp = _round_up(M, tm_fused)
        if (Mp, Kp) != (M, K):
            xp = jnp.pad(xp, ((0, Mp - M), (0, Kp - K)))
        yp = _fused_mlp(xp, w1p, b1p, w2p, b2p,
                        negative_slope=negative_slope, tm=tm_fused)
    else:
        Mp = _round_up(M, _SUBLANE)
        if (Mp, Kp) != (M, K):
            xp = jnp.pad(xp, ((0, Mp - M), (0, Kp - K)))
        # Layer 1 emits bf16 so the intermediate h is handed over at 2 B/elem.
        hp = _pallas_linear(xp, w1p, b1p, negative_slope=negative_slope,
                            out_dtype=jnp.bfloat16)
        yp = _pallas_linear(hp, w2p, b2p, negative_slope=None,
                            out_dtype=jnp.float32)

    y = yp[:M, :out_feats]
    return y.reshape(lead + (out_feats,))


def init_linear_params(key, in_features, out_features, bias=True):
    """Matches the spec's Linear.reset_parameters(): weight is
    (in_features, out_features), stdv = 1/sqrt(out_features) for both."""
    kw, kb = jax.random.split(key)
    stdv = 1.0 / math.sqrt(out_features)
    w = jax.random.uniform(kw, (in_features, out_features), jnp.float32,
                           minval=-stdv, maxval=stdv)
    if bias:
        b = jax.random.uniform(kb, (out_features,), jnp.float32,
                               minval=-stdv, maxval=stdv)
    else:
        b = jnp.zeros((out_features,), jnp.float32)
    return w, b


if __name__ == "__main__":
    key = jax.random.PRNGKey(0)
    k_x, k_1, k_2 = jax.random.split(key, 3)

    batch, in_feats, hidden_feats, out_feats = 8, 32, 64, 16
    x = jax.random.normal(k_x, (batch, in_feats), jnp.float32)
    w1, b1 = init_linear_params(k_1, in_feats, hidden_feats, bias=True)
    w2, b2 = init_linear_params(k_2, hidden_feats, out_feats, bias=True)

    # One-time parameter preparation (bf16 + lane padding), then forward.
    w1p, b1p, w2p, b2p = prepare_mlp_params(w1, b1, w2, b2)
    y = mlp_forward(x, w1p, b1p, w2p, b2p, out_feats=out_feats)
    jax.block_until_ready(y)

    # Reference with matching precision (bf16 matmul inputs, f32 accumulation).
    bf16 = jnp.bfloat16
    h_ref = jnp.dot(x.astype(bf16), w1.astype(bf16),
                    preferred_element_type=jnp.float32) + b1
    h_ref = jnp.where(h_ref >= 0, h_ref, 0.01 * h_ref)
    y_ref = jnp.dot(h_ref.astype(bf16), w2.astype(bf16),
                    preferred_element_type=jnp.float32) + b2

    assert y.shape == (batch, out_feats)
    err = float(jnp.max(jnp.abs(y - y_ref)))
    assert err < 5e-2, err
    print("KERNEL_OK")
</pallas_src>

<mosaic_0001>
module attributes {stable_mosaic.version = 11 : i64} {
  func.func @_fused_mlp_kernel(%arg0: i32, %arg1: memref<16x128xbf16, #tpu.memory_space<vmem>>, %arg2: memref<128x128xbf16, #tpu.memory_space<vmem>>, %arg3: memref<1x128xf32, #tpu.memory_space<vmem>>, %arg4: memref<128x128xbf16, #tpu.memory_space<vmem>>, %arg5: memref<1x128xf32, #tpu.memory_space<vmem>>, %arg6: memref<16x128xf32, #tpu.memory_space<vmem>>) attributes {dimension_semantics = [#tpu.dimension_semantics<parallel>], iteration_bounds = array<i64: 1>, scalar_prefetch = 0 : i64, scratch_operands = 0 : i64, tpu.core_type = #tpu.core_type<tc>, window_params = [{transform_indices = @transform_0, window_bounds = array<i64: 16, 128>}, {pipeline_mode = #tpu.pipeline_mode<synchronous>, transform_indices = @transform_1, window_bounds = array<i64: 128, 128>}, {pipeline_mode = #tpu.pipeline_mode<synchronous>, transform_indices = @transform_2, window_bounds = array<i64: 1, 128>}, {pipeline_mode = #tpu.pipeline_mode<synchronous>, transform_indices = @transform_3, window_bounds = array<i64: 128, 128>}, {pipeline_mode = #tpu.pipeline_mode<synchronous>, transform_indices = @transform_4, window_bounds = array<i64: 1, 128>}, {transform_indices = @transform_5, window_bounds = array<i64: 16, 128>}]} {
    %c0 = arith.constant 0 : index
    %c0_0 = arith.constant 0 : index
    %0 = vector.load %arg1[%c0, %c0_0] : memref<16x128xbf16, #tpu.memory_space<vmem>>, vector<16x128xbf16>
    %c0_1 = arith.constant 0 : index
    %c0_2 = arith.constant 0 : index
    %1 = vector.load %arg2[%c0_1, %c0_2] : memref<128x128xbf16, #tpu.memory_space<vmem>>, vector<128x128xbf16>
    %cst = arith.constant dense<0.000000e+00> : vector<16x128xf32>
    %2 = tpu.matmul %0, %1, %cst {dimension_numbers = #tpu.dot_dimension_numbers<[1], [0], [0], [1], [0, 0, 1, 1], [], []>} : vector<16x128xbf16>, vector<128x128xbf16>, vector<16x128xf32> -> vector<16x128xf32>
    %c0_3 = arith.constant 0 : index
    %c0_4 = arith.constant 0 : index
    %3 = vector.load %arg3[%c0_3, %c0_4] : memref<1x128xf32, #tpu.memory_space<vmem>>, vector<1x128xf32>
    %4 = vector.broadcast %3 : vector<1x128xf32> to vector<16x128xf32>
    %5 = arith.addf %2, %4 : vector<16x128xf32>
    %cst_5 = arith.constant 0.000000e+00 : f32
    %6 = vector.broadcast %cst_5 : f32 to vector<16x128xf32>
    %7 = arith.cmpf oge, %5, %6 : vector<16x128xf32>
    %cst_6 = arith.constant 0.00999999977 : f32
    %8 = vector.broadcast %cst_6 : f32 to vector<16x128xf32>
    %9 = arith.mulf %8, %5 : vector<16x128xf32>
    %10 = arith.select %7, %5, %9 : vector<16x128xi1>, vector<16x128xf32>
    %11 = arith.truncf %10 : vector<16x128xf32> to vector<16x128xbf16>
    %c0_7 = arith.constant 0 : index
    %c0_8 = arith.constant 0 : index
    %12 = vector.load %arg4[%c0_7, %c0_8] : memref<128x128xbf16, #tpu.memory_space<vmem>>, vector<128x128xbf16>
    %cst_9 = arith.constant dense<0.000000e+00> : vector<16x128xf32>
    %13 = tpu.matmul %11, %12, %cst_9 {dimension_numbers = #tpu.dot_dimension_numbers<[1], [0], [0], [1], [0, 0, 1, 1], [], []>} : vector<16x128xbf16>, vector<128x128xbf16>, vector<16x128xf32> -> vector<16x128xf32>
    %c0_10 = arith.constant 0 : index
    %c0_11 = arith.constant 0 : index
    %14 = vector.load %arg5[%c0_10, %c0_11] : memref<1x128xf32, #tpu.memory_space<vmem>>, vector<1x128xf32>
    %15 = vector.broadcast %14 : vector<1x128xf32> to vector<16x128xf32>
    %16 = arith.addf %13, %15 : vector<16x128xf32>
    %c0_12 = arith.constant 0 : index
    %c0_13 = arith.constant 0 : index
    %17 = vector.load %arg6[%c0_12, %c0_13] : memref<16x128xf32, #tpu.memory_space<vmem>>, vector<16x128xf32>
    tpu.vector_store %arg6[%c0_12, %c0_13], %16 {strides = array<i32>} : memref<16x128xf32, #tpu.memory_space<vmem>>, vector<16x128xf32>,
    return
  }
  func.func @transform_0(%arg0: i32) -> (i32, i32) {
    %c0_i32 = arith.constant 0 : i32
    %c0_i32_0 = arith.constant 0 : i32
    return %arg0, %c0_i32 : i32, i32
  }
  func.func @transform_1(%arg0: i32) -> (i32, i32) {
    %c0_i32 = arith.constant 0 : i32
    %c0_i32_0 = arith.constant 0 : i32
    %c0_i32_1 = arith.constant 0 : i32
    return %c0_i32, %c0_i32_0 : i32, i32
  }
  func.func @transform_2(%arg0: i32) -> (i32, i32) {
    %c0_i32 = arith.constant 0 : i32
    %c0_i32_0 = arith.constant 0 : i32
    %c0_i32_1 = arith.constant 0 : i32
    return %c0_i32, %c0_i32_0 : i32, i32
  }
  func.func @transform_3(%arg0: i32) -> (i32, i32) {
    %c0_i32 = arith.constant 0 : i32
    %c0_i32_0 = arith.constant 0 : i32
    %c0_i32_1 = arith.constant 0 : i32
    return %c0_i32, %c0_i32_0 : i32, i32
  }
  func.func @transform_4(%arg0: i32) -> (i32, i32) {
    %c0_i32 = arith.constant 0 : i32
    %c0_i32_0 = arith.constant 0 : i32
    %c0_i32_1 = arith.constant 0 : i32
    return %c0_i32, %c0_i32_0 : i32, i32
  }
  func.func @transform_5(%arg0: i32) -> (i32, i32) {
    %c0_i32 = arith.constant 0 : i32
    %c0_i32_0 = arith.constant 0 : i32
    return %arg0, %c0_i32 : i32, i32
  }
}

</mosaic_0001>

<llo_original>
// kernel: mlp_forward.1
$region0: #{mlp_forward.1}
  #allocation0 [shape = 'u32[]', space=smem, size = 0x4, offset = 0x4, fixed_abs, tag = 'smem constant byte address 0x4 - core index']
  #allocation1 [shape = 'u32[72,128]{1,0:T(1,128)}', space=vmem, size = 0x9000, scoped, tag = 'internal scratch']
  %s0 = inlined_call_operand.vmem [shape: bf16[16,128], index: 0, kind: input, shape index: {}]
  %s1 = inlined_call_operand.hbm [shape: bf16[128,128], index: 1, kind: input, shape index: {}]
  %s2 = inlined_call_operand.vmem [shape: f32[1,128], index: 2, kind: input, shape index: {}]
  %s3 = inlined_call_operand.hbm [shape: bf16[128,128], index: 3, kind: input, shape index: {}]
  %s4 = inlined_call_operand.vmem [shape: f32[1,128], index: 4, kind: input, shape index: {}]
  %s5 = inlined_call_operand.vmem [shape: f32[16,128], index: 5, kind: output, shape index: {}]
  %s6 = sld [smem:[#allocation0]]
  $region38: #{mlp_forward.1} parent=0
    _
  %s8 = ssub.s32 1, %s6
  %s9 = scalar_select 0, %s8, %s6
  $region1: #{mlp_forward.1} parent=0
    #allocation2 [shape = 'u8[32768]{0}', space=vmem, size = 0x8000, scoped, tag = 'input window, operand 1, single buffered']
    #allocation3 [shape = 's32[1]{0}', space=sflag, size = 0x4, scoped, tag = 'scoped memory for mlp_forward.1']
    #allocation4 [shape = 'u8[32768]{0}', space=vmem, size = 0x8000, scoped, tag = 'input window, operand 3, single buffered']
    #allocation5 [shape = 's32[1]{0}', space=sflag, size = 0x4, scoped, tag = 'scoped memory for mlp_forward.1']
    %10 = vsyncpa [#allocation3], 0
    %11 = vsyncpa [#allocation5], 0
    // Predicated region
    $region2: #{mlp_forward.1} parent=1 // pred_check
      _
    $region3: #{mlp_forward.1} parent=1 // pred_check_branch
      %13 = sbr.rel (0) target = $region5
    $region4: #{mlp_forward.1} parent=1 // pred_region
      _
    $region5: #{mlp_forward.1} parent=1 // pred_fallthru
      _
    // Predicated region
    $region6: #{mlp_forward.1} parent=1 // pred_check
      _
    $region7: #{mlp_forward.1} parent=1 // pred_check_branch
      %15 = sbr.rel (0) target = $region9
    $region8: #{mlp_forward.1} parent=1 // pred_region
      %17 = vsyncadd [#allocation3], 0
      %s18 = sshll.u32 %s1, 4
      %s19 = int_to_ptr.hbm [resolvable:$true] %s18
      %s20 = sshll.u32 [#allocation2], 4
      %s21 = int_to_ptr.vmem [resolvable:$true] %s20
      %26 = dma.hbm_to_vmem [thread:$0]  %s19, 1024, %s21, [#allocation3], 64, 64, 4
    $region9: #{mlp_forward.1} parent=1 // pred_fallthru
      _
    // Predicated region
    $region10: #{mlp_forward.1} parent=1 // pred_check
      _
    $region11: #{mlp_forward.1} parent=1 // pred_check_branch
      %28 = sbr.rel (0) target = $region13
    $region12: #{mlp_forward.1} parent=1 // pred_region
      _
    $region13: #{mlp_forward.1} parent=1 // pred_fallthru
      _
    // Predicated region
    $region14: #{mlp_forward.1} parent=1 // pred_check
      _
    $region15: #{mlp_forward.1} parent=1 // pred_check_branch
      %30 = sbr.rel (0) target = $region17
    $region16: #{mlp_forward.1} parent=1 // pred_region
      %32 = vsyncadd [#allocation5], 0
      %s33 = sshll.u32 %s3, 4
      %s34 = int_to_ptr.hbm [resolvable:$true] %s33
      %s35 = sshll.u32 [#allocation4], 4
      %s36 = int_to_ptr.vmem [resolvable:$true] %s35
      %41 = dma.hbm_to_vmem [thread:$0]  %s34, 1024, %s36, [#allocation5], 64, 64, 4
    $region17: #{mlp_forward.1} parent=1 // pred_fallthru
      _
    // Predicated region
    $region18: #{mlp_forward.1} parent=1 // pred_check
      _
    $region19: #{mlp_forward.1} parent=1 // pred_check_branch
      %43 = sbr.rel (0) target = $region21
    $region20: #{mlp_forward.1} parent=1 // pred_region
      _
    $region21: #{mlp_forward.1} parent=1 // pred_fallthru
      _
    // Predicated region
    $region22: #{mlp_forward.1} parent=1 // pred_check
      _
    $region23: #{mlp_forward.1} parent=1 // pred_check_branch
      %45 = sbr.rel (0) target = $region25
    $region24: #{mlp_forward.1} parent=1 // pred_region
      %47 = dma.done [#allocation3], 1024
    $region25: #{mlp_forward.1} parent=1 // pred_fallthru
      _
    // Predicated region
    $region26: #{mlp_forward.1} parent=1 // pred_check
      _
    $region27: #{mlp_forward.1} parent=1 // pred_check_branch
      %49 = sbr.rel (0) target = $region29
    $region28: #{mlp_forward.1} parent=1 // pred_region
      %51 = dma.done [#allocation5], 1024
    $region29: #{mlp_forward.1} parent=1 // pred_fallthru
      _
    %v52 = vld [vmem:[%s0] sm:$0xf]
    %v53 = vld [vmem:[%s0 + $0x4] sm:$0xf]
    %v54 = vld [vmem:[#allocation2] sm:$0xf]
    %v55 = vld [vmem:[#allocation2 + $0x4] sm:$0xf]
    %v56 = vld [vmem:[#allocation2 + $0x8] sm:$0xf]
    %v57 = vld [vmem:[#allocation2 + $0xc] sm:$0xf]
    %v58 = vld [vmem:[#allocation2 + $0x10] sm:$0xf]
    %v59 = vld [vmem:[#allocation2 + $0x14] sm:$0xf]
    %v60 = vld [vmem:[#allocation2 + $0x18] sm:$0xf]
    %v61 = vld [vmem:[#allocation2 + $0x1c] sm:$0xf]
    %v62 = vld [vmem:[#allocation2 + $0x20] sm:$0xf]
    %v63 = vld [vmem:[#allocation2 + $0x24] sm:$0xf]
    %v64 = vld [vmem:[#allocation2 + $0x28] sm:$0xf]
    %v65 = vld [vmem:[#allocation2 + $0x2c] sm:$0xf]
    %v66 = vld [vmem:[#allocation2 + $0x30] sm:$0xf]
    %v67 = vld [vmem:[#allocation2 + $0x34] sm:$0xf]
    %v68 = vld [vmem:[#allocation2 + $0x38] sm:$0xf]
    %v69 = vld [vmem:[#allocation2 + $0x3c] sm:$0xf]
    %v70 = vld [vmem:[%s2] sm:$0x1]
    %v72 = vperm.slane %v70, 0
    %v76 = vunpack.c.l.b16 %v52
    %v77 = vunpack.c.l.b16 %v53
    %v78 = vpack.c.b16 %v77, %v76
    %v96 = vunpack.c.l.b16 %v54
    %v97 = vunpack.c.l.b16 %v55
    %v98 = vunpack.c.l.b16 %v56
    %v99 = vunpack.c.l.b16 %v57
    %v100 = vunpack.c.l.b16 %v58
    %v101 = vunpack.c.l.b16 %v59
    %v102 = vunpack.c.l.b16 %v60
    %v103 = vunpack.c.l.b16 %v61
    %v104 = vunpack.c.l.b16 %v62
    %v105 = vunpack.c.l.b16 %v63
    %v106 = vunpack.c.l.b16 %v64
    %v107 = vunpack.c.l.b16 %v65
    %v108 = vunpack.c.l.b16 %v66
    %v109 = vunpack.c.l.b16 %v67
    %v110 = vunpack.c.l.b16 %v68
    %v111 = vunpack.c.l.b16 %v69
    %v112 = vpack.c.b16 %v97, %v96
    %v113 = vpack.c.b16 %v99, %v98
    %v114 = vpack.c.b16 %v101, %v100
    %v115 = vpack.c.b16 %v103, %v102
    %v116 = vpack.c.b16 %v105, %v104
    %v117 = vpack.c.b16 %v107, %v106
    %v118 = vpack.c.b16 %v109, %v108
    %v119 = vpack.c.b16 %v111, %v110
    %128 = vmatpush.bf16.msra.mxu0 %v119
    %129 = vmatpush.bf16.msra.mxu0 %v118
    %130 = vmatpush.bf16.msra.mxu0 %v117
    %131 = vmatpush.bf16.msra.mxu0 %v116
    %132 = vmatpush.bf16.msra.mxu0 %v115
    %133 = vmatpush.bf16.msra.mxu0 %v114
    %134 = vmatpush.bf16.msra.mxu0 %v113
    %135 = vmatpush.bf16.msra.mxu0 %v112
    %136 = vmatmul.bf16.gmra.mxu0 %v78
    %v137 = vpop.f32.mrf.mxu0
    %v138 = vadd.f32 %v72, %v137
    %v139 = vpop.f32.mrf.mxu0
    %v140 = vadd.f32 %v72, %v139
    %141 = vdwg.mxu0
    %vm142 = vcmp.ge.f32.partialorder %v138, 0.0
    %vm143 = vcmp.ge.f32.partialorder %v140, 0.0
    %v144 = vmul.f32 %v138, 0.01
    %v145 = vmul.f32 %v140, 0.01
    %v146 = vsel %vm142, %v138, %v144
    %v147 = vsel %vm143, %v140, %v145
    %v148 = vpack.c.bf16 %v147, %v146
    %v149 = vld [vmem:[#allocation4] sm:$0xf]
    %v150 = vld [vmem:[#allocation4 + $0x4] sm:$0xf]
    %v151 = vld [vmem:[#allocation4 + $0x8] sm:$0xf]
    %v152 = vld [vmem:[#allocation4 + $0xc] sm:$0xf]
    %v153 = vld [vmem:[#allocation4 + $0x10] sm:$0xf]
    %v154 = vld [vmem:[#allocation4 + $0x14] sm:$0xf]
    %v155 = vld [vmem:[#allocation4 + $0x18] sm:$0xf]
    %v156 = vld [vmem:[#allocation4 + $0x1c] sm:$0xf]
    %v157 = vld [vmem:[#allocation4 + $0x20] sm:$0xf]
    %v158 = vld [vmem:[#allocation4 + $0x24] sm:$0xf]
    %v159 = vld [vmem:[#allocation4 + $0x28] sm:$0xf]
    %v160 = vld [vmem:[#allocation4 + $0x2c] sm:$0xf]
    %v161 = vld [vmem:[#allocation4 + $0x30] sm:$0xf]
    %v162 = vld [vmem:[#allocation4 + $0x34] sm:$0xf]
    %v163 = vld [vmem:[#allocation4 + $0x38] sm:$0xf]
    %v164 = vld [vmem:[#allocation4 + $0x3c] sm:$0xf]
    %v165 = vld [vmem:[%s4] sm:$0x1]
    %v167 = vperm.slane %v165, 0
    %v185 = vunpack.c.l.b16 %v149
    %v186 = vunpack.c.l.b16 %v150
    %v187 = vunpack.c.l.b16 %v151
    %v188 = vunpack.c.l.b16 %v152
    %v189 = vunpack.c.l.b16 %v153
    %v190 = vunpack.c.l.b16 %v154
    %v191 = vunpack.c.l.b16 %v155
    %v192 = vunpack.c.l.b16 %v156
    %v193 = vunpack.c.l.b16 %v157
    %v194 = vunpack.c.l.b16 %v158
    %v195 = vunpack.c.l.b16 %v159
    %v196 = vunpack.c.l.b16 %v160
    %v197 = vunpack.c.l.b16 %v161
    %v198 = vunpack.c.l.b16 %v162
    %v199 = vunpack.c.l.b16 %v163
    %v200 = vunpack.c.l.b16 %v164
    %v201 = vpack.c.b16 %v186, %v185
    %v202 = vpack.c.b16 %v188, %v187
    %v203 = vpack.c.b16 %v190, %v189
    %v204 = vpack.c.b16 %v192, %v191
    %v205 = vpack.c.b16 %v194, %v193
    %v206 = vpack.c.b16 %v196, %v195
    %v207 = vpack.c.b16 %v198, %v197
    %v208 = vpack.c.b16 %v200, %v199
    %217 = vmatpush.bf16.msra.mxu0 %v208
    %218 = vmatpush.bf16.msra.mxu0 %v207
    %219 = vmatpush.bf16.msra.mxu0 %v206
    %220 = vmatpush.bf16.msra.mxu0 %v205
    %221 = vmatpush.bf16.msra.mxu0 %v204
    %222 = vmatpush.bf16.msra.mxu0 %v203
    %223 = vmatpush.bf16.msra.mxu0 %v202
    %224 = vmatpush.bf16.msra.mxu0 %v201
    %225 = vmatmul.bf16.gmra.mxu0 %v148
    %v226 = vpop.f32.mrf.mxu0
    %v227 = vadd.f32 %v167, %v226
    %v228 = vpop.f32.mrf.mxu0
    %v229 = vadd.f32 %v167, %v228
    %230 = vdwg.mxu0
    %231 = vst [vmem:[%s5] sm:$0xff] %v227
    %232 = vst [vmem:[%s5 + $0x8] sm:$0xff] %v229
    // Predicated region
    $region30: #{mlp_forward.1} parent=1 // pred_check
      _
    $region31: #{mlp_forward.1} parent=1 // pred_check_branch
      %234 = sbr.rel (0) target = $region33
    $region32: #{mlp_forward.1} parent=1 // pred_region
      _
    $region33: #{mlp_forward.1} parent=1 // pred_fallthru
      _
    // Predicated region
    $region34: #{mlp_forward.1} parent=1 // pred_check
      _
    $region35: #{mlp_forward.1} parent=1 // pred_check_branch
      %236 = sbr.rel (0) target = $region37
    $region36: #{mlp_forward.1} parent=1 // pred_region
      _
    $region37: #{mlp_forward.1} parent=1 // pred_fallthru
      _
    %237 = vsyncpa [#allocation3], 1
    %238 = vsyncpa [#allocation5], 1

</llo_original>
